<compile_context>
chip_gen: v5e
topology: v5e:2x2
jax: 0.10.0
libtpu: 0.0.40
codegen_flags: <defaults>
</compile_context>

<pallas_src>
import functools

import jax
import jax.numpy as jnp
from jax.experimental import pallas as pl
from jax.experimental.pallas import tpu as pltpu


LANE = 128


def _round_up(n: int, m: int) -> int:
    return ((n + m - 1) // m) * m


def _pad_last(a, target):
    pad = target - a.shape[-1]
    if pad <= 0:
        return a
    return jnp.pad(a, [(0, 0)] * (a.ndim - 1) + [(0, pad)])


def _mlp_kernel(x_ref, w1_ref, b1_ref, w2_ref, b2_ref, w3_ref, b3_ref, o_ref):
    # fc1 + sigmoid.  x is cast to the (possibly bf16) weight dtype in-kernel
    # (free VPU cast, avoids a per-call XLA cast op); accumulation is f32 on the MXU.
    x = x_ref[...].astype(w1_ref.dtype)
    h1 = jnp.dot(x, w1_ref[...], preferred_element_type=jnp.float32)
    h1 = jax.nn.sigmoid(h1 + b1_ref[...])
    # fc2 + sigmoid
    h2 = jnp.dot(h1.astype(w2_ref.dtype), w2_ref[...],
                 preferred_element_type=jnp.float32)
    h2 = jax.nn.sigmoid(h2 + b2_ref[...])
    # fc3 (no activation).  Output feature dim is pre-padded to a multiple of 128
    # (zero weight/bias columns), so this is a full-vreg unmasked store.
    out = jnp.dot(h2.astype(w3_ref.dtype), w3_ref[...],
                  preferred_element_type=jnp.float32)
    o_ref[...] = out + b3_ref[...]


def prepare_params(w1, b1, w2, b2, w3, b3, use_bf16=False):
    """One-time weight preparation (pad + optional bf16 cast), hoisted out of the hot path.

    Weights are stored (in_features, out_features), i.e. transposed from PyTorch's
    nn.Linear (out, in) convention, so the kernel runs plain x @ W + b on the MXU.
    Only the final output dim is lane-padded (zero columns) so the kernel's output
    store is lane-dense; biases stay f32 (bias add / activations are f32).
    """
    out_pad = _round_up(w3.shape[1], LANE)
    wd = jnp.bfloat16 if use_bf16 else jnp.float32
    params = (
        w1.astype(wd), b1.astype(jnp.float32),
        w2.astype(wd), b2.astype(jnp.float32),
        _pad_last(w3, out_pad).astype(wd), _pad_last(b3, out_pad).astype(jnp.float32),
    )
    # Materialize now so nothing about the prep leaks into the per-call path.
    return jax.block_until_ready(params)


@functools.partial(jax.jit, static_argnames=("out_size", "block_b"))
def mlp_forward(x, params, *, out_size, block_b=128):
    """x:(B,in).  params = prepare_params(...) output.  Returns (B, out_size) f32."""
    w1, b1, w2, b2, w3, b3 = params
    B, in_size = x.shape
    hidden = w1.shape[1]
    h2dim = w2.shape[1]
    out_pad = w3.shape[1]

    flops = 2 * B * (in_size * hidden + hidden * h2dim + h2dim * out_pad)
    transcendentals = B * (hidden + h2dim)  # sigmoids
    bytes_accessed = (x.size * x.dtype.itemsize
                      + sum(a.size * a.dtype.itemsize for a in params)
                      + B * out_pad * 4)
    cost = pl.CostEstimate(flops=flops, transcendentals=transcendentals,
                           bytes_accessed=bytes_accessed)
    out_shape = jax.ShapeDtypeStruct((B, out_pad), jnp.float32)

    if B % block_b == 0 and B // block_b >= 2:
        # Large batch: parallel batch grid (splits across TensorCores on v7x).
        # Weight/bias block indices are constant across the grid, so they stay
        # resident in VMEM (fetched once); only x / out blocks stream.
        out_padded = pl.pallas_call(
            _mlp_kernel,
            out_shape=out_shape,
            grid=(B // block_b,),
            in_specs=[
                pl.BlockSpec((block_b, in_size), lambda i: (i, 0)),
                pl.BlockSpec((in_size, hidden), lambda i: (0, 0)),
                pl.BlockSpec((1, hidden), lambda i: (0, 0)),
                pl.BlockSpec((hidden, h2dim), lambda i: (0, 0)),
                pl.BlockSpec((1, h2dim), lambda i: (0, 0)),
                pl.BlockSpec((h2dim, out_pad), lambda i: (0, 0)),
                pl.BlockSpec((1, out_pad), lambda i: (0, 0)),
            ],
            out_specs=pl.BlockSpec((block_b, out_pad), lambda i: (i, 0)),
            compiler_params=pltpu.CompilerParams(
                dimension_semantics=("parallel",)),
            cost_estimate=cost,
        )(x, *params)
    else:
        # Tiny batch (the common case here): one grid-less invocation, everything
        # resident in VMEM -- this problem is launch/overhead bound (~50 KFLOP).
        out_padded = pl.pallas_call(
            _mlp_kernel,
            out_shape=out_shape,
            in_specs=[pl.BlockSpec(memory_space=pltpu.MemorySpace.VMEM)] * 7,
            out_specs=pl.BlockSpec(memory_space=pltpu.MemorySpace.VMEM),
            cost_estimate=cost,
        )(x, *params)

    # Slice the lane padding off (inside the same jit so XLA fuses it with the
    # transfer back to the consumer / host).
    return out_padded[:, :out_size]


def init_linear(key, in_features, out_features):
    # Deterministic init mimicking nn.Linear's U(-1/sqrt(in), 1/sqrt(in)),
    # stored transposed as (in, out).
    kw, kb = jax.random.split(key)
    bound = 1.0 / jnp.sqrt(jnp.float32(in_features))
    w = jax.random.uniform(kw, (in_features, out_features), jnp.float32, -bound, bound)
    b = jax.random.uniform(kb, (1, out_features), jnp.float32, -bound, bound)
    return w, b


def reference_forward(x, w1, b1, w2, b2, w3, b3):
    mm = lambda a, b: jnp.dot(a, b, precision=jax.lax.Precision.HIGHEST)
    h1 = jax.nn.sigmoid(mm(x, w1) + b1)
    h2 = jax.nn.sigmoid(mm(h1, w2) + b2)
    return mm(h2, w3) + b3


if __name__ == "__main__":
    input_size, hidden_size, output_size = 32, 64, 16
    batch = 8

    key = jax.random.PRNGKey(0)
    kx, k1, k2, k3 = jax.random.split(key, 4)

    x = jax.random.normal(kx, (batch, input_size), jnp.float32)
    w1, b1 = init_linear(k1, input_size, hidden_size)
    w2, b2 = init_linear(k2, hidden_size, 256)
    w3, b3 = init_linear(k3, 256, output_size)

    ref = reference_forward(x, w1, b1, w2, b2, w3, b3)

    # f32 operand path (default; right choice for v5e) -- grid-less single call.
    params_f32 = prepare_params(w1, b1, w2, b2, w3, b3, use_bf16=False)
    out = jax.block_until_ready(mlp_forward(x, params_f32, out_size=output_size))
    assert out.shape == (batch, output_size)
    assert jnp.allclose(out, ref, atol=1e-4, rtol=1e-4), "f32 path mismatch"

    # bf16 operand path (v6e/v7x MXU-friendly; f32 accumulation) -- looser tolerance.
    params_bf16 = prepare_params(w1, b1, w2, b2, w3, b3, use_bf16=True)
    out_bf16 = jax.block_until_ready(mlp_forward(x, params_bf16, out_size=output_size))
    assert out_bf16.shape == (batch, output_size)
    assert jnp.allclose(out_bf16, ref, atol=2e-2, rtol=2e-2), "bf16 path mismatch"

    # Large-batch path: parallel batch grid (uses both TensorCores on v7x).
    big_b = 256
    xb = jax.random.normal(kx, (big_b, input_size), jnp.float32)
    refb = reference_forward(xb, w1, b1, w2, b2, w3, b3)
    outb = jax.block_until_ready(
        mlp_forward(xb, params_f32, out_size=output_size, block_b=128))
    assert outb.shape == (big_b, output_size)
    assert jnp.allclose(outb, refb, atol=1e-4, rtol=1e-4), "batched grid path mismatch"

    print("KERNEL_OK")
</pallas_src>

<mosaic_0001>
module attributes {stable_mosaic.version = 11 : i64} {
  func.func @_mlp_kernel(%arg0: memref<8x32xf32, #tpu.memory_space<vmem>>, %arg1: memref<32x64xf32, #tpu.memory_space<vmem>>, %arg2: memref<1x64xf32, #tpu.memory_space<vmem>>, %arg3: memref<64x256xf32, #tpu.memory_space<vmem>>, %arg4: memref<1x256xf32, #tpu.memory_space<vmem>>, %arg5: memref<256x128xf32, #tpu.memory_space<vmem>>, %arg6: memref<1x128xf32, #tpu.memory_space<vmem>>, %arg7: memref<8x128xf32, #tpu.memory_space<vmem>>) attributes {dimension_semantics = [], scalar_prefetch = 0 : i64, scratch_operands = 0 : i64, tpu.core_type = #tpu.core_type<tc>} {
    %c0 = arith.constant 0 : index
    %c0_0 = arith.constant 0 : index
    %0 = vector.load %arg0[%c0, %c0_0] : memref<8x32xf32, #tpu.memory_space<vmem>>, vector<8x32xf32>
    %c0_1 = arith.constant 0 : index
    %c0_2 = arith.constant 0 : index
    %1 = vector.load %arg1[%c0_1, %c0_2] : memref<32x64xf32, #tpu.memory_space<vmem>>, vector<32x64xf32>
    %cst = arith.constant dense<0.000000e+00> : vector<8x64xf32>
    %2 = tpu.matmul %0, %1, %cst {dimension_numbers = #tpu.dot_dimension_numbers<[1], [0], [0], [1], [0, 0, 1, 1], [], []>} : vector<8x32xf32>, vector<32x64xf32>, vector<8x64xf32> -> vector<8x64xf32>
    %c0_3 = arith.constant 0 : index
    %c0_4 = arith.constant 0 : index
    %3 = vector.load %arg2[%c0_3, %c0_4] : memref<1x64xf32, #tpu.memory_space<vmem>>, vector<1x64xf32>
    %4 = vector.broadcast %3 : vector<1x64xf32> to vector<8x64xf32>
    %5 = arith.addf %2, %4 : vector<8x64xf32>
    %6 = arith.negf %5 : vector<8x64xf32>
    %7 = math.exp %6 : vector<8x64xf32>
    %cst_5 = arith.constant 1.000000e+00 : f32
    %8 = vector.broadcast %cst_5 : f32 to vector<8x64xf32>
    %9 = arith.addf %8, %7 : vector<8x64xf32>
    %10 = arith.divf %8, %9 : vector<8x64xf32>
    %c0_6 = arith.constant 0 : index
    %c0_7 = arith.constant 0 : index
    %11 = vector.load %arg3[%c0_6, %c0_7] : memref<64x256xf32, #tpu.memory_space<vmem>>, vector<64x256xf32>
    %cst_8 = arith.constant dense<0.000000e+00> : vector<8x256xf32>
    %12 = tpu.matmul %10, %11, %cst_8 {dimension_numbers = #tpu.dot_dimension_numbers<[1], [0], [0], [1], [0, 0, 1, 1], [], []>} : vector<8x64xf32>, vector<64x256xf32>, vector<8x256xf32> -> vector<8x256xf32>
    %c0_9 = arith.constant 0 : index
    %c0_10 = arith.constant 0 : index
    %13 = vector.load %arg4[%c0_9, %c0_10] : memref<1x256xf32, #tpu.memory_space<vmem>>, vector<1x256xf32>
    %14 = vector.broadcast %13 : vector<1x256xf32> to vector<8x256xf32>
    %15 = arith.addf %12, %14 : vector<8x256xf32>
    %16 = arith.negf %15 : vector<8x256xf32>
    %17 = math.exp %16 : vector<8x256xf32>
    %cst_11 = arith.constant 1.000000e+00 : f32
    %18 = vector.broadcast %cst_11 : f32 to vector<8x256xf32>
    %19 = arith.addf %18, %17 : vector<8x256xf32>
    %20 = arith.divf %18, %19 : vector<8x256xf32>
    %c0_12 = arith.constant 0 : index
    %c0_13 = arith.constant 0 : index
    %21 = vector.load %arg5[%c0_12, %c0_13] : memref<256x128xf32, #tpu.memory_space<vmem>>, vector<256x128xf32>
    %cst_14 = arith.constant dense<0.000000e+00> : vector<8x128xf32>
    %22 = tpu.matmul %20, %21, %cst_14 {dimension_numbers = #tpu.dot_dimension_numbers<[1], [0], [0], [1], [0, 0, 1, 1], [], []>} : vector<8x256xf32>, vector<256x128xf32>, vector<8x128xf32> -> vector<8x128xf32>
    %c0_15 = arith.constant 0 : index
    %c0_16 = arith.constant 0 : index
    %23 = vector.load %arg6[%c0_15, %c0_16] : memref<1x128xf32, #tpu.memory_space<vmem>>, vector<1x128xf32>
    %24 = vector.broadcast %23 : vector<1x128xf32> to vector<8x128xf32>
    %25 = arith.addf %22, %24 : vector<8x128xf32>
    %c0_17 = arith.constant 0 : index
    %c0_18 = arith.constant 0 : index
    %26 = vector.load %arg7[%c0_17, %c0_18] : memref<8x128xf32, #tpu.memory_space<vmem>>, vector<8x128xf32>
    tpu.vector_store %arg7[%c0_17, %c0_18], %25 {strides = array<i32>} : memref<8x128xf32, #tpu.memory_space<vmem>>, vector<8x128xf32>,
    return
  }
}

</mosaic_0001>

<llo_original>
// kernel: mlp_forward.1
$region0: #{mlp_forward.1}
  #allocation0 [shape = 'u32[]', space=smem, size = 0x4, offset = 0x4, fixed_abs, tag = 'smem constant byte address 0x4 - core index']
  #allocation1 [shape = 'u32[72,128]{1,0:T(1,128)}', space=vmem, size = 0x9000, scoped, tag = 'internal scratch']
  %s0 = inlined_call_operand.hbm [shape: f32[8,32], index: 0, kind: input, shape index: {}]
  %s1 = inlined_call_operand.hbm [shape: f32[32,64], index: 1, kind: input, shape index: {}]
  %s2 = inlined_call_operand.vmem [shape: f32[1,64], index: 2, kind: input, shape index: {}]
  %s3 = inlined_call_operand.hbm [shape: f32[64,256], index: 3, kind: input, shape index: {}]
  %s4 = inlined_call_operand.vmem [shape: f32[1,256], index: 4, kind: input, shape index: {}]
  %s5 = inlined_call_operand.hbm [shape: f32[256,128], index: 5, kind: input, shape index: {}]
  %s6 = inlined_call_operand.vmem [shape: f32[1,128], index: 6, kind: input, shape index: {}]
  %s7 = inlined_call_operand.hbm [shape: f32[8,128], index: 7, kind: output, shape index: {}]
  %s8 = sld [smem:[#allocation0]]
  $region54: #{mlp_forward.1} parent=0
    _
  %s10 = ssub.s32 1, %s8
  %s11 = scalar_select 0, %s10, %s8
  $region1: #{mlp_forward.1} parent=0
    #allocation2 [shape = 'u8[4096]{0}', space=vmem, size = 0x1000, scoped, tag = 'input window, operand 0, single buffered']
    #allocation3 [shape = 's32[1]{0}', space=sflag, size = 0x4, scoped, tag = 'scoped memory for mlp_forward.1']
    #allocation4 [shape = 's32[1]{0}', space=sflag, size = 0x4, scoped, tag = 'scoped memory for mlp_forward.1']
    #allocation5 [shape = 'u8[16384]{0}', space=vmem, size = 0x4000, scoped, tag = 'input window, operand 1, single buffered']
    #allocation6 [shape = 's32[1]{0}', space=sflag, size = 0x4, scoped, tag = 'scoped memory for mlp_forward.1']
    #allocation7 [shape = 'u8[65536]{0}', space=vmem, size = 0x10000, scoped, tag = 'input window, operand 3, single buffered']
    #allocation8 [shape = 'u8[131072]{0}', space=vmem, size = 0x20000, scoped, tag = 'input window, operand 5, single buffered']
    #allocation9 [shape = 's32[1]{0}', space=sflag, size = 0x4, scoped, tag = 'scoped memory for mlp_forward.1']
    #allocation10 [shape = 'u8[4096]{0}', space=vmem, size = 0x1000, scoped, tag = 'output window, operand 0, single buffered']
    %12 = vsyncpa [#allocation3], 0
    %13 = vsyncpa [#allocation6], 0
    %14 = vsyncpa [#allocation9], 0
    %15 = vsyncpa [#allocation4], 0
    // Predicated region
    $region2: #{mlp_forward.1} parent=1 // pred_check
      _
    $region3: #{mlp_forward.1} parent=1 // pred_check_branch
      %17 = sbr.rel (0) target = $region5
    $region4: #{mlp_forward.1} parent=1 // pred_region
      %19 = vsyncadd [#allocation3], 0
      %s21 = sshll.u32 %s0, 4
      %s22 = int_to_ptr.hbm [resolvable:$true] %s21
      %s23 = sshll.u32 [#allocation2], 4
      %s24 = int_to_ptr.vmem [resolvable:$true] %s23
      %26 = dma.hbm_to_vmem [thread:$0]  %s22, 128, %s24, [#allocation3]
    $region5: #{mlp_forward.1} parent=1 // pred_fallthru
      _
    // Predicated region
    $region6: #{mlp_forward.1} parent=1 // pred_check
      _
    $region7: #{mlp_forward.1} parent=1 // pred_check_branch
      %28 = sbr.rel (0) target = $region9
    $region8: #{mlp_forward.1} parent=1 // pred_region
      %30 = vsyncadd [#allocation6], 0
      %s31 = sshll.u32 %s1, 4
      %s32 = int_to_ptr.hbm [resolvable:$true] %s31
      %s33 = sshll.u32 [#allocation5], 4
      %s34 = int_to_ptr.vmem [resolvable:$true] %s33
      %39 = dma.hbm_to_vmem [thread:$0]  %s32, 512, %s34, [#allocation6], 128, 128, 8
    $region9: #{mlp_forward.1} parent=1 // pred_fallthru
      _
    // Predicated region
    $region10: #{mlp_forward.1} parent=1 // pred_check
      _
    $region11: #{mlp_forward.1} parent=1 // pred_check_branch
      %41 = sbr.rel (0) target = $region13
    $region12: #{mlp_forward.1} parent=1 // pred_region
      _
    $region13: #{mlp_forward.1} parent=1 // pred_fallthru
      _
    // Predicated region
    $region14: #{mlp_forward.1} parent=1 // pred_check
      _
    $region15: #{mlp_forward.1} parent=1 // pred_check_branch
      %43 = sbr.rel (0) target = $region17
    $region16: #{mlp_forward.1} parent=1 // pred_region
      %45 = vsyncadd [#allocation6], 0
      %s46 = sshll.u32 %s3, 4
      %s47 = int_to_ptr.hbm [resolvable:$true] %s46
      %s48 = sshll.u32 [#allocation7], 4
      %s49 = int_to_ptr.vmem [resolvable:$true] %s48
      %54 = dma.hbm_to_vmem [thread:$0]  %s47, 2048, %s49, [#allocation6], 256, 256, 16
    $region17: #{mlp_forward.1} parent=1 // pred_fallthru
      _
    // Predicated region
    $region18: #{mlp_forward.1} parent=1 // pred_check
      _
    $region19: #{mlp_forward.1} parent=1 // pred_check_branch
      %56 = sbr.rel (0) target = $region21
    $region20: #{mlp_forward.1} parent=1 // pred_region
      _
    $region21: #{mlp_forward.1} parent=1 // pred_fallthru
      _
    // Predicated region
    $region22: #{mlp_forward.1} parent=1 // pred_check
      _
    $region23: #{mlp_forward.1} parent=1 // pred_check_branch
      %58 = sbr.rel (0) target = $region25
    $region24: #{mlp_forward.1} parent=1 // pred_region
      %60 = vsyncadd [#allocation9], 0
      %s61 = sshll.u32 %s5, 4
      %s62 = int_to_ptr.hbm [resolvable:$true] %s61
      %s63 = sshll.u32 [#allocation8], 4
      %s64 = int_to_ptr.vmem [resolvable:$true] %s63
      %69 = dma.hbm_to_vmem [thread:$0]  %s62, 4096, %s64, [#allocation9], 128, 128, 8
    $region25: #{mlp_forward.1} parent=1 // pred_fallthru
      _
    // Predicated region
    $region26: #{mlp_forward.1} parent=1 // pred_check
      _
    $region27: #{mlp_forward.1} parent=1 // pred_check_branch
      %71 = sbr.rel (0) target = $region29
    $region28: #{mlp_forward.1} parent=1 // pred_region
      _
    $region29: #{mlp_forward.1} parent=1 // pred_fallthru
      _
    // Predicated region
    $region30: #{mlp_forward.1} parent=1 // pred_check
      _
    $region31: #{mlp_forward.1} parent=1 // pred_check_branch
      %73 = sbr.rel (0) target = $region33
    $region32: #{mlp_forward.1} parent=1 // pred_region
      %75 = dma.done [#allocation3], 128
    $region33: #{mlp_forward.1} parent=1 // pred_fallthru
      _
    // Predicated region
    $region34: #{mlp_forward.1} parent=1 // pred_check
      _
    $region35: #{mlp_forward.1} parent=1 // pred_check_branch
      %77 = sbr.rel (0) target = $region37
    $region36: #{mlp_forward.1} parent=1 // pred_region
      %79 = dma.done [#allocation6], 512
    $region37: #{mlp_forward.1} parent=1 // pred_fallthru
      _
    // Predicated region
    $region38: #{mlp_forward.1} parent=1 // pred_check
      _
    $region39: #{mlp_forward.1} parent=1 // pred_check_branch
      %81 = sbr.rel (0) target = $region41
    $region40: #{mlp_forward.1} parent=1 // pred_region
      %83 = dma.done [#allocation6], 2048
    $region41: #{mlp_forward.1} parent=1 // pred_fallthru
      _
    // Predicated region
    $region42: #{mlp_forward.1} parent=1 // pred_check
      _
    $region43: #{mlp_forward.1} parent=1 // pred_check_branch
      %85 = sbr.rel (0) target = $region45
    $region44: #{mlp_forward.1} parent=1 // pred_region
      %87 = dma.done [#allocation9], 4096
    $region45: #{mlp_forward.1} parent=1 // pred_fallthru
      _
    %v88 = vld [vmem:[#allocation2] sm:$0xff]
    %v89 = vld [vmem:[#allocation5] sm:$0xff]
    %v90 = vld [vmem:[#allocation5 + $0x8] sm:$0xff]
    %v91 = vld [vmem:[#allocation5 + $0x10] sm:$0xff]
    %v92 = vld [vmem:[#allocation5 + $0x18] sm:$0xff]
    %v93 = vld [vmem:[%s2] sm:$0x1]
    %v95 = vperm.slane %v93, 0
    %vm97 = vcmask 261120
    %v99 = vsel %vm97, %v88, 0
    %101 = vmatpush.msra.mxu0 0.0
    %102 = vmatpush.msra.mxu0 0.0
    %103 = vmatpush.msra.mxu0 0.0
    %104 = vmatpush.msra.mxu0 0.0
    %105 = vmatpush.msra.mxu0 0.0
    %106 = vmatpush.msra.mxu0 0.0
    %107 = vmatpush.msra.mxu0 0.0
    %108 = vmatpush.msra.mxu0 0.0
    %109 = vmatpush.msra.mxu0 0.0
    %110 = vmatpush.msra.mxu0 0.0
    %111 = vmatpush.msra.mxu0 0.0
    %112 = vmatpush.msra.mxu0 0.0
    %113 = vmatpush.msra.mxu0 %v92
    %114 = vmatpush.msra.mxu0 %v91
    %115 = vmatpush.msra.mxu0 %v90
    %116 = vmatpush.msra.mxu0 %v89
    %117 = vmatmul.f32.gmra.mxu0 %v99
    %v118 = vpop.f32.mrf.mxu0
    %v119 = vadd.f32 %v95, %v118
    %120 = vdwg.mxu0
    %v121 = vxor.u32 %v119, 2147483648
    %v122 = vmul.f32 %v121, 1.442695
    %v123 = vpow.pop %v122
    %v124 = vadd.f32 %v123, 1.0
    %v125 = vrcp.pop %v124
    %v126 = vmul.f32 %v124, %v125
    %v127 = vsub.f32 1.0, %v126
    %v128 = vmul.f32 %v125, %v127
    %v129 = vadd.f32 %v125, %v128
    %vm130 = vweird.f32 %v124
    %vm131 = vweird.f32 %v125
    %vm132 = vmor %vm130, %vm131
    %v133 = vsel %vm132, %v125, %v129
    %v134 = vand.u32 2147483647, %v124
    %vm135 = vcmp.eq.f32.partialorder %v134, 8.507059e+37
    %v136 = vand.u32 %v124, 2147483648
    %v137 = vor.u32 1.1754944e-38, %v136
    %v138 = vsel %vm135, %v137, %v133
    %v139 = vmul.f32 1.0, %v138
    %v140 = vld [vmem:[#allocation7] sm:$0xff]
    %v141 = vld [vmem:[#allocation7 + $0x8] sm:$0xff]
    %v142 = vld [vmem:[#allocation7 + $0x10] sm:$0xff]
    %v143 = vld [vmem:[#allocation7 + $0x18] sm:$0xff]
    %v144 = vld [vmem:[#allocation7 + $0x20] sm:$0xff]
    %v145 = vld [vmem:[#allocation7 + $0x28] sm:$0xff]
    %v146 = vld [vmem:[#allocation7 + $0x30] sm:$0xff]
    %v147 = vld [vmem:[#allocation7 + $0x38] sm:$0xff]
    %v148 = vld [vmem:[#allocation7 + $0x40] sm:$0xff]
    %v149 = vld [vmem:[#allocation7 + $0x48] sm:$0xff]
    %v150 = vld [vmem:[#allocation7 + $0x50] sm:$0xff]
    %v151 = vld [vmem:[#allocation7 + $0x58] sm:$0xff]
    %v152 = vld [vmem:[#allocation7 + $0x60] sm:$0xff]
    %v153 = vld [vmem:[#allocation7 + $0x68] sm:$0xff]
    %v154 = vld [vmem:[#allocation7 + $0x70] sm:$0xff]
    %v155 = vld [vmem:[#allocation7 + $0x78] sm:$0xff]
    %v156 = vld [vmem:[%s4] sm:$0x3]
    %v158 = vperm.slane %v156, 0
    %v159 = vperm.slane %v156, 1
    %vm162 = vcmask 523264
    %v164 = vsel %vm162, %v139, 0
    %166 = vmatpush.msra.mxu0 0.0
    %167 = vmatpush.msra.mxu0 0.0
    %168 = vmatpush.msra.mxu0 0.0
    %169 = vmatpush.msra.mxu0 0.0
    %170 = vmatpush.msra.mxu0 0.0
    %171 = vmatpush.msra.mxu0 0.0
    %172 = vmatpush.msra.mxu0 0.0
    %173 = vmatpush.msra.mxu0 0.0
    %174 = vmatpush.msra.mxu0 %v154
    %175 = vmatpush.msra.mxu0 %v152
    %176 = vmatpush.msra.mxu0 %v150
    %177 = vmatpush.msra.mxu0 %v148
    %178 = vmatpush.msra.mxu0 %v146
    %179 = vmatpush.msra.mxu0 %v144
    %180 = vmatpush.msra.mxu0 %v142
    %181 = vmatpush.msra.mxu0 %v140
    %182 = vmatmul.f32.gmra.mxu0 %v164
    %v183 = vpop.f32.mrf.mxu0
    %v184 = vadd.f32 %v158, %v183
    %185 = vdwg.mxu0
    %186 = vmatpush.msra.mxu0 0.0
    %187 = vmatpush.msra.mxu0 0.0
    %188 = vmatpush.msra.mxu0 0.0
    %189 = vmatpush.msra.mxu0 0.0
    %190 = vmatpush.msra.mxu0 0.0
    %191 = vmatpush.msra.mxu0 0.0
    %192 = vmatpush.msra.mxu0 0.0
    %193 = vmatpush.msra.mxu0 0.0
    %194 = vmatpush.msra.mxu0 %v155
    %195 = vmatpush.msra.mxu0 %v153
    %196 = vmatpush.msra.mxu0 %v151
    %197 = vmatpush.msra.mxu0 %v149
    %198 = vmatpush.msra.mxu0 %v147
    %199 = vmatpush.msra.mxu0 %v145
    %200 = vmatpush.msra.mxu0 %v143
    %201 = vmatpush.msra.mxu0 %v141
    %202 = vmatmul.f32.gmra.mxu0 %v164
    %v203 = vpop.f32.mrf.mxu0
    %v204 = vadd.f32 %v159, %v203
    %205 = vdwg.mxu0
    %v206 = vxor.u32 %v184, 2147483648
    %v207 = vxor.u32 %v204, 2147483648
    %v208 = vmul.f32 %v206, 1.442695
    %v209 = vpow.pop %v208
    %v210 = vmul.f32 %v207, 1.442695
    %v211 = vpow.pop %v210
    %v212 = vadd.f32 %v209, 1.0
    %v213 = vadd.f32 %v211, 1.0
    %v214 = vrcp.pop %v212
    %v215 = vmul.f32 %v212, %v214
    %v216 = vsub.f32 1.0, %v215
    %v217 = vmul.f32 %v214, %v216
    %v218 = vadd.f32 %v214, %v217
    %vm219 = vweird.f32 %v212
    %vm220 = vweird.f32 %v214
    %vm221 = vmor %vm219, %vm220
    %v222 = vsel %vm221, %v214, %v218
    %v223 = vand.u32 2147483647, %v212
    %vm224 = vcmp.eq.f32.partialorder %v223, 8.507059e+37
    %v225 = vand.u32 %v212, 2147483648
    %v226 = vor.u32 1.1754944e-38, %v225
    %v227 = vsel %vm224, %v226, %v222
    %v228 = vmul.f32 1.0, %v227
    %v229 = vrcp.pop %v213
    %v230 = vmul.f32 %v213, %v229
    %v231 = vsub.f32 1.0, %v230
    %v232 = vmul.f32 %v229, %v231
    %v233 = vadd.f32 %v229, %v232
    %vm234 = vweird.f32 %v213
    %vm235 = vweird.f32 %v229
    %vm236 = vmor %vm234, %vm235
    %v237 = vsel %vm236, %v229, %v233
    %v238 = vand.u32 2147483647, %v213
    %vm239 = vcmp.eq.f32.partialorder %v238, 8.507059e+37
    %v240 = vand.u32 %v213, 2147483648
    %v241 = vor.u32 1.1754944e-38, %v240
    %v242 = vsel %vm239, %v241, %v237
    %v243 = vmul.f32 1.0, %v242
    %v244 = vld [vmem:[#allocation8] sm:$0xff]
    %v245 = vld [vmem:[#allocation8 + $0x8] sm:$0xff]
    %v246 = vld [vmem:[#allocation8 + $0x10] sm:$0xff]
    %v247 = vld [vmem:[#allocation8 + $0x18] sm:$0xff]
    %v248 = vld [vmem:[#allocation8 + $0x20] sm:$0xff]
    %v249 = vld [vmem:[#allocation8 + $0x28] sm:$0xff]
    %v250 = vld [vmem:[#allocation8 + $0x30] sm:$0xff]
    %v251 = vld [vmem:[#allocation8 + $0x38] sm:$0xff]
    %v252 = vld [vmem:[#allocation8 + $0x40] sm:$0xff]
    %v253 = vld [vmem:[#allocation8 + $0x48] sm:$0xff]
    %v254 = vld [vmem:[#allocation8 + $0x50] sm:$0xff]
    %v255 = vld [vmem:[#allocation8 + $0x58] sm:$0xff]
    %v256 = vld [vmem:[#allocation8 + $0x60] sm:$0xff]
    %v257 = vld [vmem:[#allocation8 + $0x68] sm:$0xff]
    %v258 = vld [vmem:[#allocation8 + $0x70] sm:$0xff]
    %v259 = vld [vmem:[#allocation8 + $0x78] sm:$0xff]
    %v260 = vld [vmem:[#allocation8 + $0x80] sm:$0xff]
    %v261 = vld [vmem:[#allocation8 + $0x88] sm:$0xff]
    %v262 = vld [vmem:[#allocation8 + $0x90] sm:$0xff]
    %v263 = vld [vmem:[#allocation8 + $0x98] sm:$0xff]
    %v264 = vld [vmem:[#allocation8 + $0xa0] sm:$0xff]
    %v265 = vld [vmem:[#allocation8 + $0xa8] sm:$0xff]
    %v266 = vld [vmem:[#allocation8 + $0xb0] sm:$0xff]
    %v267 = vld [vmem:[#allocation8 + $0xb8] sm:$0xff]
    %v268 = vld [vmem:[#allocation8 + $0xc0] sm:$0xff]
    %v269 = vld [vmem:[#allocation8 + $0xc8] sm:$0xff]
    %v270 = vld [vmem:[#allocation8 + $0xd0] sm:$0xff]
    %v271 = vld [vmem:[#allocation8 + $0xd8] sm:$0xff]
    %v272 = vld [vmem:[#allocation8 + $0xe0] sm:$0xff]
    %v273 = vld [vmem:[#allocation8 + $0xe8] sm:$0xff]
    %v274 = vld [vmem:[#allocation8 + $0xf0] sm:$0xff]
    %v275 = vld [vmem:[#allocation8 + $0xf8] sm:$0xff]
    %v276 = vld [vmem:[%s6] sm:$0x1]
    %v278 = vperm.slane %v276, 0
    %280 = vmatpush.msra.mxu0 %v259
    %281 = vmatpush.msra.mxu0 %v258
    %282 = vmatpush.msra.mxu0 %v257
    %283 = vmatpush.msra.mxu0 %v256
    %284 = vmatpush.msra.mxu0 %v255
    %285 = vmatpush.msra.mxu0 %v254
    %286 = vmatpush.msra.mxu0 %v253
    %287 = vmatpush.msra.mxu0 %v252
    %288 = vmatpush.msra.mxu0 %v251
    %289 = vmatpush.msra.mxu0 %v250
    %290 = vmatpush.msra.mxu0 %v249
    %291 = vmatpush.msra.mxu0 %v248
    %292 = vmatpush.msra.mxu0 %v247
    %293 = vmatpush.msra.mxu0 %v246
    %294 = vmatpush.msra.mxu0 %v245
    %295 = vmatpush.msra.mxu0 %v244
    %296 = vmatmul.f32.gmra.mxu0 %v228
    %v297 = vpop.f32.mrf.mxu0
    %v298 = vadd.f32 %v278, %v297
    %299 = vdwg.mxu0
    %300 = vmatpush.msra.mxu0 %v275
    %301 = vmatpush.msra.mxu0 %v274
    %302 = vmatpush.msra.mxu0 %v273
    %303 = vmatpush.msra.mxu0 %v272
    %304 = vmatpush.msra.mxu0 %v271
    %305 = vmatpush.msra.mxu0 %v270
    %306 = vmatpush.msra.mxu0 %v269
    %307 = vmatpush.msra.mxu0 %v268
    %308 = vmatpush.msra.mxu0 %v267
    %309 = vmatpush.msra.mxu0 %v266
    %310 = vmatpush.msra.mxu0 %v265
    %311 = vmatpush.msra.mxu0 %v264
    %312 = vmatpush.msra.mxu0 %v263
    %313 = vmatpush.msra.mxu0 %v262
    %314 = vmatpush.msra.mxu0 %v261
    %315 = vmatpush.msra.mxu0 %v260
    %316 = vmatmul.f32.gmra.mxu0 %v243
    %v317 = vpop.f32.mrf.mxu0
    %v318 = vadd.f32 %v298, %v317
    %319 = vdwg.mxu0
    %320 = vst [vmem:[#allocation10] sm:$0xff] %v318
    // Predicated region
    $region46: #{mlp_forward.1} parent=1 // pred_check
      _
    $region47: #{mlp_forward.1} parent=1 // pred_check_branch
      %322 = sbr.rel (0) target = $region49
    $region48: #{mlp_forward.1} parent=1 // pred_region
      %324 = vsyncadd [#allocation4], 0
      %s326 = sshll.u32 [#allocation10], 4
      %s327 = int_to_ptr.vmem [resolvable:$true] %s326
      %s328 = sshll.u32 %s7, 4
      %s329 = int_to_ptr.hbm [resolvable:$true] %s328
      %331 = dma.vmem_to_hbm [thread:$0]  %s327, 128, %s329, [#allocation4]
    $region49: #{mlp_forward.1} parent=1 // pred_fallthru
      _
    // Predicated region
    $region50: #{mlp_forward.1} parent=1 // pred_check
      _
    $region51: #{mlp_forward.1} parent=1 // pred_check_branch
      %333 = sbr.rel (0) target = $region53
    $region52: #{mlp_forward.1} parent=1 // pred_region
      %335 = dma.done [#allocation4], 128
    $region53: #{mlp_forward.1} parent=1 // pred_fallthru
      _
    %336 = vsyncpa [#allocation3], 1
    %337 = vsyncpa [#allocation6], 1
    %338 = vsyncpa [#allocation9], 1
    %339 = vsyncpa [#allocation4], 1

</llo_original>
